<compile_context>
chip_gen: v7x
topology: tpu7x:2x2x1
jax: 0.10.0
libtpu: 0.0.40
codegen_flags: <defaults>
</compile_context>

<pallas_src>
import functools

import jax
import jax.numpy as jnp
from jax.experimental import pallas as pl
from jax.experimental.pallas import tpu as pltpu

_SQRT2_INV = 0.7071067811865476
_SQRT_2_OVER_PI = 0.7978845608028654


def _round_up(n, m):
    return ((n + m - 1) // m) * m


def _gelu(x, approximate):
    if approximate:
        # tanh form -> EUP (its own VLIW slot); numerics differ slightly from PyTorch default.
        return 0.5 * x * (1.0 + jnp.tanh(jnp.float32(_SQRT_2_OVER_PI)
                                         * (x + 0.044715 * x * x * x)))
    # PyTorch F.gelu default: exact erf-based GELU, computed in f32.
    return 0.5 * x * (1.0 + jax.lax.erf(x * jnp.float32(_SQRT2_INV)))


def _actor_kernel(x_ref, w1_ref, b1_ref, w2_ref, b2_ref, w3_ref, b3_ref, o_ref,
                  *, approximate_gelu):
    # x tile: (tb, D_in) f32 -> cast once to bf16 for the MXU.
    x = x_ref[...].astype(jnp.bfloat16)

    # shared_1: bf16 MXU matmul, f32 accumulate, f32 bias + GELU.
    h1 = jnp.dot(x, w1_ref[...], preferred_element_type=jnp.float32) + b1_ref[...]
    h1 = _gelu(h1, approximate_gelu)

    # shared_2
    h2 = jnp.dot(h1.astype(jnp.bfloat16), w2_ref[...],
                 preferred_element_type=jnp.float32) + b2_ref[...]
    h2 = _gelu(h2, approximate_gelu)

    # out_policy (no activation); store only the true action columns (no lane padding).
    logits = jnp.dot(h2.astype(jnp.bfloat16), w3_ref[...],
                     preferred_element_type=jnp.float32) + b3_ref[...]
    o_ref[...] = logits.astype(o_ref.dtype)


def _choose_batch_tile(batch, tile_b):
    """Balanced batch tiles (waste < 8 rows); >=2 tiles for moderately large B (v7x megacore)."""
    n = max(1, pl.cdiv(batch, tile_b))
    if n < 2 and batch >= 256:
        n = 2
    if n <= 1:
        return batch                       # one block == full array dim (always legal)
    return min(_round_up(pl.cdiv(batch, n), 8), batch)


@functools.partial(jax.jit,
                   static_argnames=("tile_b", "approximate_gelu", "single_buffer_weights"))
def _actor_forward_impl(x, params, *, tile_b, approximate_gelu, single_buffer_weights):
    w1, b1 = params["w1"], params["b1"]
    w2, b2 = params["w2"], params["b2"]
    w3, b3 = params["w3"], params["b3"]

    B, D_in = x.shape
    H_p = w1.shape[1]                       # hidden dim, already padded to 128 lanes
    A = w3.shape[1]                         # true num_action (unpadded)

    tb = _choose_batch_tile(B, tile_b)
    grid = (pl.cdiv(B, tb),)                # ragged last block handled by masked writes

    def resident(shape):
        # Constant block index -> stays VMEM-resident across all grid steps; a block
        # that never changes does not need double-buffering.
        if single_buffer_weights:
            return pl.BlockSpec(shape, lambda i: (0, 0), pipeline_mode=pl.Buffered(1))
        return pl.BlockSpec(shape, lambda i: (0, 0))

    # Explicit VMEM budget: resident weights/biases + double-buffered x/out tiles
    # + f32/bf16 hidden intermediates, with headroom, capped below physical VMEM.
    n_wbuf = 1 if single_buffer_weights else 2
    weight_bytes = 2 * (D_in * H_p + H_p * H_p + H_p * A) * n_wbuf
    bias_bytes = 4 * (2 * H_p + A) * n_wbuf
    io_bytes = 2 * tb * (D_in * 4 + A * 4)
    inter_bytes = 2 * tb * H_p * (4 + 2)
    needed = weight_bytes + bias_bytes + io_bytes + inter_bytes
    try:
        phys_vmem = int(pltpu.get_tpu_info().vmem_capacity_bytes)
    except Exception:
        phys_vmem = 64 << 20                # v7x per-TC physical VMEM (smallest generation)
    vmem_limit = max(32 << 20, min(int(needed * 1.5) + (4 << 20), int(phys_vmem * 0.85)))

    flops = 2 * B * (D_in * H_p + H_p * H_p + H_p * A)
    bytes_accessed = (x.size * 4 + (w1.size + w2.size + w3.size) * 2
                      + (b1.size + b2.size + b3.size) * 4 + B * A * 4)
    cost = pl.CostEstimate(flops=flops, transcendentals=2 * B * H_p,
                           bytes_accessed=bytes_accessed)

    return pl.pallas_call(
        functools.partial(_actor_kernel, approximate_gelu=approximate_gelu),
        out_shape=jax.ShapeDtypeStruct((B, A), jnp.float32),
        grid=grid,
        in_specs=[
            pl.BlockSpec((tb, D_in), lambda i: (i, 0)),   # x: pipelined batch tile (f32)
            resident((D_in, H_p)), resident((1, H_p)),    # w1, b1
            resident((H_p, H_p)), resident((1, H_p)),     # w2, b2
            resident((H_p, A)),   resident((1, A)),       # w3, b3
        ],
        out_specs=pl.BlockSpec((tb, A), lambda i: (i, 0)),
        compiler_params=pltpu.CompilerParams(
            dimension_semantics=("parallel",),
            vmem_limit_bytes=vmem_limit),
        cost_estimate=cost,
    )(x, w1, b1, w2, b2, w3, b3)


def actor_forward(x, params, *, tile_b=512, approximate_gelu=False):
    """x: [B, input_dim] f32.  params: output of prepare_params (padded bf16 weights)."""
    try:
        return _actor_forward_impl(x, params, tile_b=tile_b,
                                   approximate_gelu=approximate_gelu,
                                   single_buffer_weights=True)
    except Exception:
        # pl.Buffered(1) unsupported on this jax/libtpu combo: fall back to the
        # default double-buffered (still VMEM-resident) weight specs.
        return _actor_forward_impl(x, params, tile_b=tile_b,
                                   approximate_gelu=approximate_gelu,
                                   single_buffer_weights=False)


def prepare_params(raw):
    """One-time (per parameter update) lane padding + bf16 cast, hoisted out of the forward path.

    Only the hidden dim is padded (zero padding is exact: GELU(0) = 0 and padded
    rows/cols contribute 0 through every matmul).  Input-feature and action dims
    keep their true sizes.
    """
    w1, b1 = raw["w1"], raw["b1"]
    w2, b2 = raw["w2"], raw["b2"]
    w3, b3 = raw["w3"], raw["b3"]
    D_in, H = w1.shape
    A = w3.shape[1]
    H_p = _round_up(H, 128)

    def pad(a, rows, cols, dtype):
        out = jnp.zeros((rows, cols), dtype)
        return out.at[: a.shape[0], : a.shape[1]].set(a.astype(dtype))

    return {
        "w1": pad(w1, D_in, H_p, jnp.bfloat16),
        "b1": pad(b1.reshape(1, -1), 1, H_p, jnp.float32),
        "w2": pad(w2, H_p, H_p, jnp.bfloat16),
        "b2": pad(b2.reshape(1, -1), 1, H_p, jnp.float32),
        "w3": pad(w3, H_p, A, jnp.bfloat16),
        "b3": b3.reshape(1, -1).astype(jnp.float32),
    }


def init_params(key, input_dim, hidden_dim, num_action):
    """Deterministic PyTorch-nn.Linear-style init: U(-1/sqrt(fan_in), 1/sqrt(fan_in)).

    Weights are stored [in_features, out_features] so the kernel computes y = x @ W + b.
    """
    ks = jax.random.split(key, 6)

    def lin(kw, kb, fan_in, fan_out):
        bound = 1.0 / jnp.sqrt(jnp.float32(fan_in))
        w = jax.random.uniform(kw, (fan_in, fan_out), jnp.float32, -bound, bound)
        b = jax.random.uniform(kb, (1, fan_out), jnp.float32, -bound, bound)
        return w, b

    w1, b1 = lin(ks[0], ks[1], input_dim, hidden_dim)
    w2, b2 = lin(ks[2], ks[3], hidden_dim, hidden_dim)
    w3, b3 = lin(ks[4], ks[5], hidden_dim, num_action)
    return {"w1": w1, "b1": b1, "w2": w2, "b2": b2, "w3": w3, "b3": b3}


if __name__ == "__main__":
    key = jax.random.PRNGKey(0)
    k_x, k_p = jax.random.split(key)

    batch, input_dim, hidden_dim, num_action = 8, 16, 32, 6
    x = jax.random.normal(k_x, (batch, input_dim), jnp.float32)
    raw_params = init_params(k_p, input_dim, hidden_dim, num_action)
    params = prepare_params(raw_params)        # hoisted: done once, reused every forward

    out = actor_forward(x, params)
    out = jax.block_until_ready(out)
    assert out.shape == (batch, num_action)

    # Reference #1: same numerics as the kernel (bf16 matmul operands, f32 accumulation,
    # f32 bias + exact erf GELU) -> tight tolerance.
    def ref_bf16(x, p):
        def lin(a, w, b):
            return jnp.dot(a.astype(jnp.bfloat16), w.astype(jnp.bfloat16),
                           preferred_element_type=jnp.float32) + b
        h = _gelu(lin(x, p["w1"], p["b1"]), False)
        h = _gelu(lin(h, p["w2"], p["b2"]), False)
        return lin(h, p["w3"], p["b3"])

    expected_bf16 = ref_bf16(x, raw_params)
    assert jnp.allclose(out, expected_bf16, atol=1e-4, rtol=1e-4)

    # Reference #2: full-f32 PyTorch-equivalent forward; bf16 matmul operands add a
    # small relative error, so tolerance is loosened accordingly.
    def ref_f32(x, p):
        h = jax.nn.gelu(x @ p["w1"] + p["b1"], approximate=False)
        h = jax.nn.gelu(h @ p["w2"] + p["b2"], approximate=False)
        return h @ p["w3"] + p["b3"]

    expected_f32 = ref_f32(x, raw_params)
    assert jnp.allclose(out, expected_f32, atol=2e-2, rtol=2e-2)

    print("KERNEL_OK")
</pallas_src>

<mosaic_0001>
module attributes {stable_mosaic.version = 11 : i64} {
  func.func @_actor_kernel(%arg0: i32, %arg1: memref<8x16xf32, #tpu.memory_space<vmem>>, %arg2: memref<16x128xbf16, #tpu.memory_space<vmem>>, %arg3: memref<1x128xf32, #tpu.memory_space<vmem>>, %arg4: memref<128x128xbf16, #tpu.memory_space<vmem>>, %arg5: memref<1x128xf32, #tpu.memory_space<vmem>>, %arg6: memref<128x6xbf16, #tpu.memory_space<vmem>>, %arg7: memref<1x6xf32, #tpu.memory_space<vmem>>, %arg8: memref<8x6xf32, #tpu.memory_space<vmem>>) attributes {dimension_semantics = [#tpu.dimension_semantics<parallel>], iteration_bounds = array<i64: 1>, scalar_prefetch = 0 : i64, scratch_operands = 0 : i64, tpu.core_type = #tpu.core_type<tc>, window_params = [{transform_indices = @transform_0, window_bounds = array<i64: 8, 16>}, {pipeline_mode = #tpu.pipeline_mode<synchronous>, transform_indices = @transform_1, window_bounds = array<i64: 16, 128>}, {pipeline_mode = #tpu.pipeline_mode<synchronous>, transform_indices = @transform_2, window_bounds = array<i64: 1, 128>}, {pipeline_mode = #tpu.pipeline_mode<synchronous>, transform_indices = @transform_3, window_bounds = array<i64: 128, 128>}, {pipeline_mode = #tpu.pipeline_mode<synchronous>, transform_indices = @transform_4, window_bounds = array<i64: 1, 128>}, {pipeline_mode = #tpu.pipeline_mode<synchronous>, transform_indices = @transform_5, window_bounds = array<i64: 128, 6>}, {pipeline_mode = #tpu.pipeline_mode<synchronous>, transform_indices = @transform_6, window_bounds = array<i64: 1, 6>}, {transform_indices = @transform_7, window_bounds = array<i64: 8, 6>}]} {
    %c0 = arith.constant 0 : index
    %c0_0 = arith.constant 0 : index
    %0 = vector.load %arg1[%c0, %c0_0] : memref<8x16xf32, #tpu.memory_space<vmem>>, vector<8x16xf32>
    %1 = arith.truncf %0 : vector<8x16xf32> to vector<8x16xbf16>
    %c0_1 = arith.constant 0 : index
    %c0_2 = arith.constant 0 : index
    %2 = vector.load %arg2[%c0_1, %c0_2] : memref<16x128xbf16, #tpu.memory_space<vmem>>, vector<16x128xbf16>
    %cst = arith.constant dense<0.000000e+00> : vector<8x128xf32>
    %3 = tpu.matmul %1, %2, %cst {dimension_numbers = #tpu.dot_dimension_numbers<[1], [0], [0], [1], [0, 0, 1, 1], [], []>} : vector<8x16xbf16>, vector<16x128xbf16>, vector<8x128xf32> -> vector<8x128xf32>
    %c0_3 = arith.constant 0 : index
    %c0_4 = arith.constant 0 : index
    %4 = vector.load %arg3[%c0_3, %c0_4] : memref<1x128xf32, #tpu.memory_space<vmem>>, vector<1x128xf32>
    %5 = vector.broadcast %4 : vector<1x128xf32> to vector<8x128xf32>
    %6 = arith.addf %3, %5 : vector<8x128xf32>
    %cst_5 = arith.constant 5.000000e-01 : f32
    %7 = vector.broadcast %cst_5 : f32 to vector<8x128xf32>
    %8 = arith.mulf %7, %6 : vector<8x128xf32>
    %cst_6 = arith.constant 0.707106769 : f32
    %9 = vector.broadcast %cst_6 : f32 to vector<8x128xf32>
    %10 = arith.mulf %6, %9 : vector<8x128xf32>
    %11 = math.erf %10 : vector<8x128xf32>
    %cst_7 = arith.constant 1.000000e+00 : f32
    %12 = vector.broadcast %cst_7 : f32 to vector<8x128xf32>
    %13 = arith.addf %12, %11 : vector<8x128xf32>
    %14 = arith.mulf %8, %13 : vector<8x128xf32>
    %15 = arith.truncf %14 : vector<8x128xf32> to vector<8x128xbf16>
    %c0_8 = arith.constant 0 : index
    %c0_9 = arith.constant 0 : index
    %16 = vector.load %arg4[%c0_8, %c0_9] : memref<128x128xbf16, #tpu.memory_space<vmem>>, vector<128x128xbf16>
    %cst_10 = arith.constant dense<0.000000e+00> : vector<8x128xf32>
    %17 = tpu.matmul %15, %16, %cst_10 {dimension_numbers = #tpu.dot_dimension_numbers<[1], [0], [0], [1], [0, 0, 1, 1], [], []>} : vector<8x128xbf16>, vector<128x128xbf16>, vector<8x128xf32> -> vector<8x128xf32>
    %c0_11 = arith.constant 0 : index
    %c0_12 = arith.constant 0 : index
    %18 = vector.load %arg5[%c0_11, %c0_12] : memref<1x128xf32, #tpu.memory_space<vmem>>, vector<1x128xf32>
    %19 = vector.broadcast %18 : vector<1x128xf32> to vector<8x128xf32>
    %20 = arith.addf %17, %19 : vector<8x128xf32>
    %cst_13 = arith.constant 5.000000e-01 : f32
    %21 = vector.broadcast %cst_13 : f32 to vector<8x128xf32>
    %22 = arith.mulf %21, %20 : vector<8x128xf32>
    %cst_14 = arith.constant 0.707106769 : f32
    %23 = vector.broadcast %cst_14 : f32 to vector<8x128xf32>
    %24 = arith.mulf %20, %23 : vector<8x128xf32>
    %25 = math.erf %24 : vector<8x128xf32>
    %cst_15 = arith.constant 1.000000e+00 : f32
    %26 = vector.broadcast %cst_15 : f32 to vector<8x128xf32>
    %27 = arith.addf %26, %25 : vector<8x128xf32>
    %28 = arith.mulf %22, %27 : vector<8x128xf32>
    %29 = arith.truncf %28 : vector<8x128xf32> to vector<8x128xbf16>
    %c0_16 = arith.constant 0 : index
    %c0_17 = arith.constant 0 : index
    %30 = vector.load %arg6[%c0_16, %c0_17] : memref<128x6xbf16, #tpu.memory_space<vmem>>, vector<128x6xbf16>
    %cst_18 = arith.constant dense<0.000000e+00> : vector<8x6xf32>
    %31 = tpu.matmul %29, %30, %cst_18 {dimension_numbers = #tpu.dot_dimension_numbers<[1], [0], [0], [1], [0, 0, 1, 1], [], []>} : vector<8x128xbf16>, vector<128x6xbf16>, vector<8x6xf32> -> vector<8x6xf32>
    %c0_19 = arith.constant 0 : index
    %c0_20 = arith.constant 0 : index
    %32 = vector.load %arg7[%c0_19, %c0_20] : memref<1x6xf32, #tpu.memory_space<vmem>>, vector<1x6xf32>
    %33 = vector.broadcast %32 : vector<1x6xf32> to vector<8x6xf32>
    %34 = arith.addf %31, %33 : vector<8x6xf32>
    %c0_21 = arith.constant 0 : index
    %c0_22 = arith.constant 0 : index
    %35 = vector.load %arg8[%c0_21, %c0_22] : memref<8x6xf32, #tpu.memory_space<vmem>>, vector<8x6xf32>
    tpu.vector_store %arg8[%c0_21, %c0_22], %34 {strides = array<i32>} : memref<8x6xf32, #tpu.memory_space<vmem>>, vector<8x6xf32>,
    return
  }
  func.func @transform_0(%arg0: i32) -> (i32, i32) {
    %c0_i32 = arith.constant 0 : i32
    %c0_i32_0 = arith.constant 0 : i32
    return %arg0, %c0_i32 : i32, i32
  }
  func.func @transform_1(%arg0: i32) -> (i32, i32) {
    %c0_i32 = arith.constant 0 : i32
    %c0_i32_0 = arith.constant 0 : i32
    %c0_i32_1 = arith.constant 0 : i32
    return %c0_i32, %c0_i32_0 : i32, i32
  }
  func.func @transform_2(%arg0: i32) -> (i32, i32) {
    %c0_i32 = arith.constant 0 : i32
    %c0_i32_0 = arith.constant 0 : i32
    %c0_i32_1 = arith.constant 0 : i32
    return %c0_i32, %c0_i32_0 : i32, i32
  }
  func.func @transform_3(%arg0: i32) -> (i32, i32) {
    %c0_i32 = arith.constant 0 : i32
    %c0_i32_0 = arith.constant 0 : i32
    %c0_i32_1 = arith.constant 0 : i32
    return %c0_i32, %c0_i32_0 : i32, i32
  }
  func.func @transform_4(%arg0: i32) -> (i32, i32) {
    %c0_i32 = arith.constant 0 : i32
    %c0_i32_0 = arith.constant 0 : i32
    %c0_i32_1 = arith.constant 0 : i32
    return %c0_i32, %c0_i32_0 : i32, i32
  }
  func.func @transform_5(%arg0: i32) -> (i32, i32) {
    %c0_i32 = arith.constant 0 : i32
    %c0_i32_0 = arith.constant 0 : i32
    %c0_i32_1 = arith.constant 0 : i32
    return %c0_i32, %c0_i32_0 : i32, i32
  }
  func.func @transform_6(%arg0: i32) -> (i32, i32) {
    %c0_i32 = arith.constant 0 : i32
    %c0_i32_0 = arith.constant 0 : i32
    %c0_i32_1 = arith.constant 0 : i32
    return %c0_i32, %c0_i32_0 : i32, i32
  }
  func.func @transform_7(%arg0: i32) -> (i32, i32) {
    %c0_i32 = arith.constant 0 : i32
    %c0_i32_0 = arith.constant 0 : i32
    return %arg0, %c0_i32 : i32, i32
  }
}

module attributes {stable_mosaic.version = 11 : i64} {
  func.func @_actor_kernel(%arg0: i32, %arg1: memref<8x16xf32, #tpu.memory_space<vmem>>, %arg2: memref<16x128xbf16, #tpu.memory_space<vmem>>, %arg3: memref<1x128xf32, #tpu.memory_space<vmem>>, %arg4: memref<128x128xbf16, #tpu.memory_space<vmem>>, %arg5: memref<1x128xf32, #tpu.memory_space<vmem>>, %arg6: memref<128x6xbf16, #tpu.memory_space<vmem>>, %arg7: memref<1x6xf32, #tpu.memory_space<vmem>>, %arg8: memref<8x6xf32, #tpu.memory_space<vmem>>) attributes {dimension_semantics = [#tpu.dimension_semantics<parallel>], iteration_bounds = array<i64: 1>, scalar_prefetch = 0 : i64, scratch_operands = 0 : i64, tpu.core_type = #tpu.core_type<tc>, window_params = [{transform_indices = @transform_0, window_bounds = array<i64: 8, 16>}, {pipeline_mode = #tpu.pipeline_mode<synchronous>, transform_indices = @transform_1, window_bounds = array<i64: 16, 128>}, {pipeline_mode = #tpu.pipeline_mode<synchronous>, transform_indices = @transform_2, window_bounds = array<i64: 1, 128>}, {pipeline_mode = #tpu.pipeline_mode<synchronous>, transform_indices = @transform_3, window_bounds = array<i64: 128, 128>}, {pipeline_mode = #tpu.pipeline_mode<synchronous>, transform_indices = @transform_4, window_bounds = array<i64: 1, 128>}, {pipeline_mode = #tpu.pipeline_mode<synchronous>, transform_indices = @transform_5, window_bounds = array<i64: 128, 6>}, {pipeline_mode = #tpu.pipeline_mode<synchronous>, transform_indices = @transform_6, window_bounds = array<i64: 1, 6>}, {transform_indices = @transform_7, window_bounds = array<i64: 8, 6>}]} {
    %c0 = arith.constant 0 : index
    %c0_0 = arith.constant 0 : index
    %0 = vector.load %arg1[%c0, %c0_0] : memref<8x16xf32, #tpu.memory_space<vmem>>, vector<8x16xf32>
    %1 = arith.truncf %0 : vector<8x16xf32> to vector<8x16xbf16>
    %c0_1 = arith.constant 0 : index
    %c0_2 = arith.constant 0 : index
    %2 = vector.load %arg2[%c0_1, %c0_2] : memref<16x128xbf16, #tpu.memory_space<vmem>>, vector<16x128xbf16>
    %cst = arith.constant dense<0.000000e+00> : vector<8x128xf32>
    %3 = tpu.matmul %1, %2, %cst {dimension_numbers = #tpu.dot_dimension_numbers<[1], [0], [0], [1], [0, 0, 1, 1], [], []>} : vector<8x16xbf16>, vector<16x128xbf16>, vector<8x128xf32> -> vector<8x128xf32>
    %c0_3 = arith.constant 0 : index
    %c0_4 = arith.constant 0 : index
    %4 = vector.load %arg3[%c0_3, %c0_4] : memref<1x128xf32, #tpu.memory_space<vmem>>, vector<1x128xf32>
    %5 = vector.broadcast %4 : vector<1x128xf32> to vector<8x128xf32>
    %6 = arith.addf %3, %5 : vector<8x128xf32>
    %cst_5 = arith.constant 5.000000e-01 : f32
    %7 = vector.broadcast %cst_5 : f32 to vector<8x128xf32>
    %8 = arith.mulf %7, %6 : vector<8x128xf32>
    %cst_6 = arith.constant 0.707106769 : f32
    %9 = vector.broadcast %cst_6 : f32 to vector<8x128xf32>
    %10 = arith.mulf %6, %9 : vector<8x128xf32>
    %11 = math.erf %10 : vector<8x128xf32>
    %cst_7 = arith.constant 1.000000e+00 : f32
    %12 = vector.broadcast %cst_7 : f32 to vector<8x128xf32>
    %13 = arith.addf %12, %11 : vector<8x128xf32>
    %14 = arith.mulf %8, %13 : vector<8x128xf32>
    %15 = arith.truncf %14 : vector<8x128xf32> to vector<8x128xbf16>
    %c0_8 = arith.constant 0 : index
    %c0_9 = arith.constant 0 : index
    %16 = vector.load %arg4[%c0_8, %c0_9] : memref<128x128xbf16, #tpu.memory_space<vmem>>, vector<128x128xbf16>
    %cst_10 = arith.constant dense<0.000000e+00> : vector<8x128xf32>
    %17 = tpu.matmul %15, %16, %cst_10 {dimension_numbers = #tpu.dot_dimension_numbers<[1], [0], [0], [1], [0, 0, 1, 1], [], []>} : vector<8x128xbf16>, vector<128x128xbf16>, vector<8x128xf32> -> vector<8x128xf32>
    %c0_11 = arith.constant 0 : index
    %c0_12 = arith.constant 0 : index
    %18 = vector.load %arg5[%c0_11, %c0_12] : memref<1x128xf32, #tpu.memory_space<vmem>>, vector<1x128xf32>
    %19 = vector.broadcast %18 : vector<1x128xf32> to vector<8x128xf32>
    %20 = arith.addf %17, %19 : vector<8x128xf32>
    %cst_13 = arith.constant 5.000000e-01 : f32
    %21 = vector.broadcast %cst_13 : f32 to vector<8x128xf32>
    %22 = arith.mulf %21, %20 : vector<8x128xf32>
    %cst_14 = arith.constant 0.707106769 : f32
    %23 = vector.broadcast %cst_14 : f32 to vector<8x128xf32>
    %24 = arith.mulf %20, %23 : vector<8x128xf32>
    %25 = math.erf %24 : vector<8x128xf32>
    %cst_15 = arith.constant 1.000000e+00 : f32
    %26 = vector.broadcast %cst_15 : f32 to vector<8x128xf32>
    %27 = arith.addf %26, %25 : vector<8x128xf32>
    %28 = arith.mulf %22, %27 : vector<8x128xf32>
    %29 = arith.truncf %28 : vector<8x128xf32> to vector<8x128xbf16>
    %c0_16 = arith.constant 0 : index
    %c0_17 = arith.constant 0 : index
    %30 = vector.load %arg6[%c0_16, %c0_17] : memref<128x6xbf16, #tpu.memory_space<vmem>>, vector<128x6xbf16>
    %cst_18 = arith.constant dense<0.000000e+00> : vector<8x6xf32>
    %31 = tpu.matmul %29, %30, %cst_18 {dimension_numbers = #tpu.dot_dimension_numbers<[1], [0], [0], [1], [0, 0, 1, 1], [], []>} : vector<8x128xbf16>, vector<128x6xbf16>, vector<8x6xf32> -> vector<8x6xf32>
    %c0_19 = arith.constant 0 : index
    %c0_20 = arith.constant 0 : index
    %32 = vector.load %arg7[%c0_19, %c0_20] : memref<1x6xf32, #tpu.memory_space<vmem>>, vector<1x6xf32>
    %33 = vector.broadcast %32 : vector<1x6xf32> to vector<8x6xf32>
    %34 = arith.addf %31, %33 : vector<8x6xf32>
    %c0_21 = arith.constant 0 : index
    %c0_22 = arith.constant 0 : index
    %35 = vector.load %arg8[%c0_21, %c0_22] : memref<8x6xf32, #tpu.memory_space<vmem>>, vector<8x6xf32>
    tpu.vector_store %arg8[%c0_21, %c0_22], %34 {strides = array<i32>} : memref<8x6xf32, #tpu.memory_space<vmem>>, vector<8x6xf32>,
    return
  }
  func.func @transform_0(%arg0: i32) -> (i32, i32) {
    %c0_i32 = arith.constant 0 : i32
    %c0_i32_0 = arith.constant 0 : i32
    return %arg0, %c0_i32 : i32, i32
  }
  func.func @transform_1(%arg0: i32) -> (i32, i32) {
    %c0_i32 = arith.constant 0 : i32
    %c0_i32_0 = arith.constant 0 : i32
    %c0_i32_1 = arith.constant 0 : i32
    return %c0_i32, %c0_i32_0 : i32, i32
  }
  func.func @transform_2(%arg0: i32) -> (i32, i32) {
    %c0_i32 = arith.constant 0 : i32
    %c0_i32_0 = arith.constant 0 : i32
    %c0_i32_1 = arith.constant 0 : i32
    return %c0_i32, %c0_i32_0 : i32, i32
  }
  func.func @transform_3(%arg0: i32) -> (i32, i32) {
    %c0_i32 = arith.constant 0 : i32
    %c0_i32_0 = arith.constant 0 : i32
    %c0_i32_1 = arith.constant 0 : i32
    return %c0_i32, %c0_i32_0 : i32, i32
  }
  func.func @transform_4(%arg0: i32) -> (i32, i32) {
    %c0_i32 = arith.constant 0 : i32
    %c0_i32_0 = arith.constant 0 : i32
    %c0_i32_1 = arith.constant 0 : i32
    return %c0_i32, %c0_i32_0 : i32, i32
  }
  func.func @transform_5(%arg0: i32) -> (i32, i32) {
    %c0_i32 = arith.constant 0 : i32
    %c0_i32_0 = arith.constant 0 : i32
    %c0_i32_1 = arith.constant 0 : i32
    return %c0_i32, %c0_i32_0 : i32, i32
  }
  func.func @transform_6(%arg0: i32) -> (i32, i32) {
    %c0_i32 = arith.constant 0 : i32
    %c0_i32_0 = arith.constant 0 : i32
    %c0_i32_1 = arith.constant 0 : i32
    return %c0_i32, %c0_i32_0 : i32, i32
  }
  func.func @transform_7(%arg0: i32) -> (i32, i32) {
    %c0_i32 = arith.constant 0 : i32
    %c0_i32_0 = arith.constant 0 : i32
    return %arg0, %c0_i32 : i32, i32
  }
}

</mosaic_0001>

<llo_original>
// kernel: _actor_forward_impl.1
$region0: #{_actor_forward_impl.1}
  #allocation0 [shape = 'u32[]', space=smem, size = 0x4, offset = 0x4, fixed_abs, tag = 'smem constant byte address 0x4 - core index']
  #allocation1 [shape = 'u32[144,128]{1,0:T(1,128)}', space=vmem, size = 0x12000, scoped, tag = 'internal scratch']
  %s0 = inlined_call_operand.vmem [shape: f32[8,16], index: 0, kind: input, shape index: {}]
  %s1 = inlined_call_operand.vmem [shape: bf16[16,128], index: 1, kind: input, shape index: {}]
  %s2 = inlined_call_operand.vmem [shape: f32[1,128], index: 2, kind: input, shape index: {}]
  %s3 = inlined_call_operand.vmem [shape: bf16[128,128], index: 3, kind: input, shape index: {}]
  %s4 = inlined_call_operand.vmem [shape: f32[1,128], index: 4, kind: input, shape index: {}]
  %s5 = inlined_call_operand.vmem [shape: bf16[128,6], index: 5, kind: input, shape index: {}]
  %s6 = inlined_call_operand.vmem [shape: f32[1,6], index: 6, kind: input, shape index: {}]
  %s7 = inlined_call_operand.hbm [shape: f32[8,6], index: 7, kind: output, shape index: {}]
  %s8 = sld [smem:[#allocation0]]
  $region38: #{_actor_forward_impl.1} parent=0
    _
  %s10 = ssub.s32 1, %s8
  %s11 = scalar_select 0, %s10, %s8
  $region1: #{_actor_forward_impl.1} parent=0
    #allocation2 [shape = 'u8[4096]{0}', space=vmem, size = 0x1000, scoped, tag = 'output window, operand 0, single buffered']
    #allocation3 [shape = 's32[1]{0}', space=sflag, size = 0x4, scoped, tag = 'scoped memory for _actor_forward_impl.1']
    %12 = vsyncpa [#allocation3], 0
    // Predicated region
    $region2: #{_actor_forward_impl.1} parent=1 // pred_check
      _
    $region3: #{_actor_forward_impl.1} parent=1 // pred_check_branch
      %14 = sbr.rel (0) target = $region5
    $region4: #{_actor_forward_impl.1} parent=1 // pred_region
      _
    $region5: #{_actor_forward_impl.1} parent=1 // pred_fallthru
      _
    // Predicated region
    $region6: #{_actor_forward_impl.1} parent=1 // pred_check
      _
    $region7: #{_actor_forward_impl.1} parent=1 // pred_check_branch
      %16 = sbr.rel (0) target = $region9
    $region8: #{_actor_forward_impl.1} parent=1 // pred_region
      _
    $region9: #{_actor_forward_impl.1} parent=1 // pred_fallthru
      _
    // Predicated region
    $region10: #{_actor_forward_impl.1} parent=1 // pred_check
      _
    $region11: #{_actor_forward_impl.1} parent=1 // pred_check_branch
      %18 = sbr.rel (0) target = $region13
    $region12: #{_actor_forward_impl.1} parent=1 // pred_region
      _
    $region13: #{_actor_forward_impl.1} parent=1 // pred_fallthru
      _
    // Predicated region
    $region14: #{_actor_forward_impl.1} parent=1 // pred_check
      _
    $region15: #{_actor_forward_impl.1} parent=1 // pred_check_branch
      %20 = sbr.rel (0) target = $region17
    $region16: #{_actor_forward_impl.1} parent=1 // pred_region
      _
    $region17: #{_actor_forward_impl.1} parent=1 // pred_fallthru
      _
    // Predicated region
    $region18: #{_actor_forward_impl.1} parent=1 // pred_check
      _
    $region19: #{_actor_forward_impl.1} parent=1 // pred_check_branch
      %22 = sbr.rel (0) target = $region21
    $region20: #{_actor_forward_impl.1} parent=1 // pred_region
      _
    $region21: #{_actor_forward_impl.1} parent=1 // pred_fallthru
      _
    // Predicated region
    $region22: #{_actor_forward_impl.1} parent=1 // pred_check
      _
    $region23: #{_actor_forward_impl.1} parent=1 // pred_check_branch
      %24 = sbr.rel (0) target = $region25
    $region24: #{_actor_forward_impl.1} parent=1 // pred_region
      _
    $region25: #{_actor_forward_impl.1} parent=1 // pred_fallthru
      _
    // Predicated region
    $region26: #{_actor_forward_impl.1} parent=1 // pred_check
      _
    $region27: #{_actor_forward_impl.1} parent=1 // pred_check_branch
      %26 = sbr.rel (0) target = $region29
    $region28: #{_actor_forward_impl.1} parent=1 // pred_region
      _
    $region29: #{_actor_forward_impl.1} parent=1 // pred_fallthru
      _
    %v28 = vld [vmem:[%s0] sm:$0xff]
    %v29 = vpack.c.bf16 %v28, %v28
    %v30 = vld [vmem:[%s1] sm:$0xf]
    %v31 = vld [vmem:[%s1 + $0x4] sm:$0xf]
    %v32 = vld [vmem:[%s2] sm:$0x1]
    %v34 = vlaneseq
    %v35 = vshrl.u32 %v34, 7
    %v36 = vsub.s32 0, %v35
    %v37 = vrot.slane %v32, %v36
    %v41 = vunpack.c.l.b16 %v30
    %v42 = vunpack.c.l.b16 %v31
    %v43 = vpack.c.b16 %v42, %v41
    %vm45 = vcmask 130048
    %v47 = vsel %vm45, %v29, 0
    %49 = vmatprep.subr.bf16.mxu0 0
    %50 = vmatpush1.bf16.msra.mxu0 %v43
    %51 = vmatprep.subr.bf16.mxu0 0
    %52 = vmatpush1.bf16.msra.mxu0 0
    %53 = vmatprep.subr.bf16.mxu0 0
    %54 = vmatpush1.bf16.msra.mxu0 0
    %55 = vmatprep.subr.bf16.mxu0 0
    %56 = vmatpush1.bf16.msra.mxu0 0
    %57 = vmatprep.subr.bf16.mxu0 0
    %58 = vmatpush1.bf16.msra.mxu0 0
    %59 = vmatprep.subr.bf16.mxu0 0
    %60 = vmatpush1.bf16.msra.mxu0 0
    %61 = vmatprep.subr.bf16.mxu0 0
    %62 = vmatpush1.bf16.msra.mxu0 0
    %63 = vmatprep.subr.bf16.mxu0 0
    %64 = vmatpush1.bf16.msra.mxu0 0
    %65 = vmatprep.subr.bf16.mxu0 0
    %66 = vmatpush1.bf16.msra.mxu0 0
    %67 = vmatprep.subr.bf16.mxu0 0
    %68 = vmatpush1.bf16.msra.mxu0 0
    %69 = vmatprep.subr.bf16.mxu0 0
    %70 = vmatpush1.bf16.msra.mxu0 0
    %71 = vmatprep.subr.bf16.mxu0 0
    %72 = vmatpush1.bf16.msra.mxu0 0
    %73 = vmatprep.subr.bf16.mxu0 0
    %74 = vmatpush1.bf16.msra.mxu0 0
    %75 = vmatprep.subr.bf16.mxu0 0
    %76 = vmatpush1.bf16.msra.mxu0 0
    %77 = vmatprep.subr.bf16.mxu0 0
    %78 = vmatpush1.bf16.msra.mxu0 0
    %79 = vmatprep.subr.bf16.mxu0 0
    %80 = vmatpush1.bf16.msra.mxu0 0
    %81 = vmatprep.mubr.bf16.mxu0 0
    %82 = vmatmul.mubr.bf16.gmra.mrb[0].mxu0 %v47
    %v83 = vpop.f32.mrb[0].mxu0
    %v84 = vadd.f32 %v37, %v83
    %v85 = vpop.f32.mrb[0].mxu0
    %v86 = vpop.f32.mrb[0].mxu0
    %v87 = vpop.f32.mrb[0].mxu0
    %88 = vdwg.mxu0
    %v89 = vmul.f32 %v84, 0.5
    %v90 = vmul.f32 %v84, 0.70710677
    %v91 = verf.f32.pop %v90
    %v92 = vadd.f32 %v91, 1.0
    %v93 = vmul.f32 %v89, %v92
    %v94 = vpack.c.bf16 %v93, %v93
    %v95 = vld [vmem:[%s3] sm:$0xf]
    %v96 = vld [vmem:[%s3 + $0x4] sm:$0xf]
    %v97 = vld [vmem:[%s3 + $0x8] sm:$0xf]
    %v98 = vld [vmem:[%s3 + $0xc] sm:$0xf]
    %v99 = vld [vmem:[%s3 + $0x10] sm:$0xf]
    %v100 = vld [vmem:[%s3 + $0x14] sm:$0xf]
    %v101 = vld [vmem:[%s3 + $0x18] sm:$0xf]
    %v102 = vld [vmem:[%s3 + $0x1c] sm:$0xf]
    %v103 = vld [vmem:[%s3 + $0x20] sm:$0xf]
    %v104 = vld [vmem:[%s3 + $0x24] sm:$0xf]
    %v105 = vld [vmem:[%s3 + $0x28] sm:$0xf]
    %v106 = vld [vmem:[%s3 + $0x2c] sm:$0xf]
    %v107 = vld [vmem:[%s3 + $0x30] sm:$0xf]
    %v108 = vld [vmem:[%s3 + $0x34] sm:$0xf]
    %v109 = vld [vmem:[%s3 + $0x38] sm:$0xf]
    %v110 = vld [vmem:[%s3 + $0x3c] sm:$0xf]
    %v111 = vld [vmem:[%s4] sm:$0x1]
    %v113 = vlaneseq
    %v114 = vshrl.u32 %v113, 7
    %v115 = vsub.s32 0, %v114
    %v116 = vrot.slane %v111, %v115
    %v134 = vunpack.c.l.b16 %v95
    %v135 = vunpack.c.l.b16 %v96
    %v136 = vunpack.c.l.b16 %v97
    %v137 = vunpack.c.l.b16 %v98
    %v138 = vunpack.c.l.b16 %v99
    %v139 = vunpack.c.l.b16 %v100
    %v140 = vunpack.c.l.b16 %v101
    %v141 = vunpack.c.l.b16 %v102
    %v142 = vunpack.c.l.b16 %v103
    %v143 = vunpack.c.l.b16 %v104
    %v144 = vunpack.c.l.b16 %v105
    %v145 = vunpack.c.l.b16 %v106
    %v146 = vunpack.c.l.b16 %v107
    %v147 = vunpack.c.l.b16 %v108
    %v148 = vunpack.c.l.b16 %v109
    %v149 = vunpack.c.l.b16 %v110
    %v150 = vpack.c.b16 %v135, %v134
    %v151 = vpack.c.b16 %v137, %v136
    %v152 = vpack.c.b16 %v139, %v138
    %v153 = vpack.c.b16 %v141, %v140
    %v154 = vpack.c.b16 %v143, %v142
    %v155 = vpack.c.b16 %v145, %v144
    %v156 = vpack.c.b16 %v147, %v146
    %v157 = vpack.c.b16 %v149, %v148
    %166 = vmatprep.subr.bf16.mxu0 0
    %167 = vmatpush1.bf16.msra.mxu0 %v150
    %168 = vmatprep.subr.bf16.mxu0 0
    %169 = vmatpush1.bf16.msra.mxu0 %v151
    %170 = vmatprep.subr.bf16.mxu0 0
    %171 = vmatpush1.bf16.msra.mxu0 %v152
    %172 = vmatprep.subr.bf16.mxu0 0
    %173 = vmatpush1.bf16.msra.mxu0 %v153
    %174 = vmatprep.subr.bf16.mxu0 0
    %175 = vmatpush1.bf16.msra.mxu0 %v154
    %176 = vmatprep.subr.bf16.mxu0 0
    %177 = vmatpush1.bf16.msra.mxu0 %v155
    %178 = vmatprep.subr.bf16.mxu0 0
    %179 = vmatpush1.bf16.msra.mxu0 %v156
    %180 = vmatprep.subr.bf16.mxu0 0
    %181 = vmatpush1.bf16.msra.mxu0 %v157
    %182 = vmatprep.subr.bf16.mxu0 0
    %183 = vmatpush1.bf16.msra.mxu0 0
    %184 = vmatprep.subr.bf16.mxu0 0
    %185 = vmatpush1.bf16.msra.mxu0 0
    %186 = vmatprep.subr.bf16.mxu0 0
    %187 = vmatpush1.bf16.msra.mxu0 0
    %188 = vmatprep.subr.bf16.mxu0 0
    %189 = vmatpush1.bf16.msra.mxu0 0
    %190 = vmatprep.subr.bf16.mxu0 0
    %191 = vmatpush1.bf16.msra.mxu0 0
    %192 = vmatprep.subr.bf16.mxu0 0
    %193 = vmatpush1.bf16.msra.mxu0 0
    %194 = vmatprep.subr.bf16.mxu0 0
    %195 = vmatpush1.bf16.msra.mxu0 0
    %196 = vmatprep.subr.bf16.mxu0 0
    %197 = vmatpush1.bf16.msra.mxu0 0
    %198 = vmatprep.mubr.bf16.mxu0 0
    %199 = vmatmul.mubr.bf16.gmra.mrb[0].mxu0 %v94
    %v200 = vpop.f32.mrb[0].mxu0
    %v201 = vadd.f32 %v116, %v200
    %v202 = vpop.f32.mrb[0].mxu0
    %v203 = vpop.f32.mrb[0].mxu0
    %v204 = vpop.f32.mrb[0].mxu0
    %205 = vdwg.mxu0
    %v206 = vmul.f32 %v201, 0.5
    %v207 = vmul.f32 %v201, 0.70710677
    %v208 = verf.f32.pop %v207
    %v209 = vadd.f32 %v208, 1.0
    %v210 = vmul.f32 %v206, %v209
    %v211 = vpack.c.bf16 %v210, %v210
    %v212 = vld [vmem:[%s5] sm:$0xf]
    %v213 = vld [vmem:[%s5 + $0x4] sm:$0xf]
    %v214 = vld [vmem:[%s5 + $0x8] sm:$0xf]
    %v215 = vld [vmem:[%s5 + $0xc] sm:$0xf]
    %v216 = vld [vmem:[%s5 + $0x10] sm:$0xf]
    %v217 = vld [vmem:[%s5 + $0x14] sm:$0xf]
    %v218 = vld [vmem:[%s5 + $0x18] sm:$0xf]
    %v219 = vld [vmem:[%s5 + $0x1c] sm:$0xf]
    %v220 = vld [vmem:[%s5 + $0x20] sm:$0xf]
    %v221 = vld [vmem:[%s5 + $0x24] sm:$0xf]
    %v222 = vld [vmem:[%s5 + $0x28] sm:$0xf]
    %v223 = vld [vmem:[%s5 + $0x2c] sm:$0xf]
    %v224 = vld [vmem:[%s5 + $0x30] sm:$0xf]
    %v225 = vld [vmem:[%s5 + $0x34] sm:$0xf]
    %v226 = vld [vmem:[%s5 + $0x38] sm:$0xf]
    %v227 = vld [vmem:[%s5 + $0x3c] sm:$0xf]
    %v228 = vld [vmem:[%s6] sm:$0x1]
    %v230 = vlaneseq
    %v231 = vshrl.u32 %v230, 7
    %v232 = vsub.s32 0, %v231
    %v233 = vrot.slane %v228, %v232
    %v251 = vunpack.c.l.b16 %v212
    %v252 = vunpack.c.l.b16 %v213
    %v253 = vunpack.c.l.b16 %v214
    %v254 = vunpack.c.l.b16 %v215
    %v255 = vunpack.c.l.b16 %v216
    %v256 = vunpack.c.l.b16 %v217
    %v257 = vunpack.c.l.b16 %v218
    %v258 = vunpack.c.l.b16 %v219
    %v259 = vunpack.c.l.b16 %v220
    %v260 = vunpack.c.l.b16 %v221
    %v261 = vunpack.c.l.b16 %v222
    %v262 = vunpack.c.l.b16 %v223
    %v263 = vunpack.c.l.b16 %v224
    %v264 = vunpack.c.l.b16 %v225
    %v265 = vunpack.c.l.b16 %v226
    %v266 = vunpack.c.l.b16 %v227
    %v267 = vpack.c.b16 %v252, %v251
    %v268 = vpack.c.b16 %v254, %v253
    %v269 = vpack.c.b16 %v256, %v255
    %v270 = vpack.c.b16 %v258, %v257
    %v271 = vpack.c.b16 %v260, %v259
    %v272 = vpack.c.b16 %v262, %v261
    %v273 = vpack.c.b16 %v264, %v263
    %v274 = vpack.c.b16 %v266, %v265
    %283 = vmatprep.subr.bf16.mxu0 0
    %284 = vmatpush1.bf16.msra.mxu0 %v267
    %285 = vmatprep.subr.bf16.mxu0 0
    %286 = vmatpush1.bf16.msra.mxu0 %v268
    %287 = vmatprep.subr.bf16.mxu0 0
    %288 = vmatpush1.bf16.msra.mxu0 %v269
    %289 = vmatprep.subr.bf16.mxu0 0
    %290 = vmatpush1.bf16.msra.mxu0 %v270
    %291 = vmatprep.subr.bf16.mxu0 0
    %292 = vmatpush1.bf16.msra.mxu0 %v271
    %293 = vmatprep.subr.bf16.mxu0 0
    %294 = vmatpush1.bf16.msra.mxu0 %v272
    %295 = vmatprep.subr.bf16.mxu0 0
    %296 = vmatpush1.bf16.msra.mxu0 %v273
    %297 = vmatprep.subr.bf16.mxu0 0
    %298 = vmatpush1.bf16.msra.mxu0 %v274
    %299 = vmatprep.subr.bf16.mxu0 0
    %300 = vmatpush1.bf16.msra.mxu0 0
    %301 = vmatprep.subr.bf16.mxu0 0
    %302 = vmatpush1.bf16.msra.mxu0 0
    %303 = vmatprep.subr.bf16.mxu0 0
    %304 = vmatpush1.bf16.msra.mxu0 0
    %305 = vmatprep.subr.bf16.mxu0 0
    %306 = vmatpush1.bf16.msra.mxu0 0
    %307 = vmatprep.subr.bf16.mxu0 0
    %308 = vmatpush1.bf16.msra.mxu0 0
    %309 = vmatprep.subr.bf16.mxu0 0
    %310 = vmatpush1.bf16.msra.mxu0 0
    %311 = vmatprep.subr.bf16.mxu0 0
    %312 = vmatpush1.bf16.msra.mxu0 0
    %313 = vmatprep.subr.bf16.mxu0 0
    %314 = vmatpush1.bf16.msra.mxu0 0
    %315 = vmatprep.mubr.bf16.mxu0 0
    %316 = vmatmul.mubr.bf16.gmra.mrb[0].mxu0 %v211
    %v317 = vpop.f32.mrb[0].mxu0
    %v318 = vadd.f32 %v233, %v317
    %v319 = vpop.f32.mrb[0].mxu0
    %v320 = vpop.f32.mrb[0].mxu0
    %v321 = vpop.f32.mrb[0].mxu0
    %322 = vdwg.mxu0
    %vm323 = vcmask 48128
    %324 = vst.msk [vmem:[#allocation2] sm:$0xff] %vm323, %v318
    // Predicated region
    $region30: #{_actor_forward_impl.1} parent=1 // pred_check
      _
    $region31: #{_actor_forward_impl.1} parent=1 // pred_check_branch
      %326 = sbr.rel (0) target = $region33
    $region32: #{_actor_forward_impl.1} parent=1 // pred_region
      %s328 = ssub.s32 128, 128
      %329 = vsyncadd [#allocation3], %s328
      %s331 = sshll.u32 [#allocation2], 4
      %s332 = int_to_ptr.vmem [resolvable:$true] %s331
      %334 = dma.vmem_to_hbm [thread:$0]  %s332, 128, %s7, [#allocation3]
    $region33: #{_actor_forward_impl.1} parent=1 // pred_fallthru
      _
    // Predicated region
    $region34: #{_actor_forward_impl.1} parent=1 // pred_check
      _
    $region35: #{_actor_forward_impl.1} parent=1 // pred_check_branch
      %336 = sbr.rel (0) target = $region37
    $region36: #{_actor_forward_impl.1} parent=1 // pred_region
      %337 = dma.done [#allocation3], 128
    $region37: #{_actor_forward_impl.1} parent=1 // pred_fallthru
      _
    %338 = vsyncpa [#allocation3], 1

// kernel: _actor_forward_impl.1
$region0: #{_actor_forward_impl.1}
  #allocation0 [shape = 'u32[]', space=smem, size = 0x4, offset = 0x4, fixed_abs, tag = 'smem constant byte address 0x4 - core index']
  #allocation1 [shape = 'u32[144,128]{1,0:T(1,128)}', space=vmem, size = 0x12000, scoped, tag = 'internal scratch']
  %s0 = inlined_call_operand.vmem [shape: f32[8,16], index: 0, kind: input, shape index: {}]
  %s1 = inlined_call_operand.vmem [shape: bf16[16,128], index: 1, kind: input, shape index: {}]
  %s2 = inlined_call_operand.vmem [shape: f32[1,128], index: 2, kind: input, shape index: {}]
  %s3 = inlined_call_operand.vmem [shape: bf16[128,128], index: 3, kind: input, shape index: {}]
  %s4 = inlined_call_operand.vmem [shape: f32[1,128], index: 4, kind: input, shape index: {}]
  %s5 = inlined_call_operand.vmem [shape: bf16[128,6], index: 5, kind: input, shape index: {}]
  %s6 = inlined_call_operand.vmem [shape: f32[1,6], index: 6, kind: input, shape index: {}]
  %s7 = inlined_call_operand.hbm [shape: f32[8,6], index: 7, kind: output, shape index: {}]
  %s8 = sld [smem:[#allocation0]]
  $region38: #{_actor_forward_impl.1} parent=0
    _
  %s10 = ssub.s32 1, %s8
  %s11 = scalar_select 0, %s10, %s8
  $region1: #{_actor_forward_impl.1} parent=0
    #allocation2 [shape = 'u8[4096]{0}', space=vmem, size = 0x1000, scoped, tag = 'output window, operand 0, single buffered']
    #allocation3 [shape = 's32[1]{0}', space=sflag, size = 0x4, scoped, tag = 'scoped memory for _actor_forward_impl.1']
    %12 = vsyncpa [#allocation3], 0
    // Predicated region
    $region2: #{_actor_forward_impl.1} parent=1 // pred_check
      _
    $region3: #{_actor_forward_impl.1} parent=1 // pred_check_branch
      %14 = sbr.rel (0) target = $region5
    $region4: #{_actor_forward_impl.1} parent=1 // pred_region
      _
    $region5: #{_actor_forward_impl.1} parent=1 // pred_fallthru
      _
    // Predicated region
    $region6: #{_actor_forward_impl.1} parent=1 // pred_check
      _
    $region7: #{_actor_forward_impl.1} parent=1 // pred_check_branch
      %16 = sbr.rel (0) target = $region9
    $region8: #{_actor_forward_impl.1} parent=1 // pred_region
      _
    $region9: #{_actor_forward_impl.1} parent=1 // pred_fallthru
      _
    // Predicated region
    $region10: #{_actor_forward_impl.1} parent=1 // pred_check
      _
    $region11: #{_actor_forward_impl.1} parent=1 // pred_check_branch
      %18 = sbr.rel (0) target = $region13
    $region12: #{_actor_forward_impl.1} parent=1 // pred_region
      _
    $region13: #{_actor_forward_impl.1} parent=1 // pred_fallthru
      _
    // Predicated region
    $region14: #{_actor_forward_impl.1} parent=1 // pred_check
      _
    $region15: #{_actor_forward_impl.1} parent=1 // pred_check_branch
      %20 = sbr.rel (0) target = $region17
    $region16: #{_actor_forward_impl.1} parent=1 // pred_region
      _
    $region17: #{_actor_forward_impl.1} parent=1 // pred_fallthru
      _
    // Predicated region
    $region18: #{_actor_forward_impl.1} parent=1 // pred_check
      _
    $region19: #{_actor_forward_impl.1} parent=1 // pred_check_branch
      %22 = sbr.rel (0) target = $region21
    $region20: #{_actor_forward_impl.1} parent=1 // pred_region
      _
    $region21: #{_actor_forward_impl.1} parent=1 // pred_fallthru
      _
    // Predicated region
    $region22: #{_actor_forward_impl.1} parent=1 // pred_check
      _
    $region23: #{_actor_forward_impl.1} parent=1 // pred_check_branch
      %24 = sbr.rel (0) target = $region25
    $region24: #{_actor_forward_impl.1} parent=1 // pred_region
      _
    $region25: #{_actor_forward_impl.1} parent=1 // pred_fallthru
      _
    // Predicated region
    $region26: #{_actor_forward_impl.1} parent=1 // pred_check
      _
    $region27: #{_actor_forward_impl.1} parent=1 // pred_check_branch
      %26 = sbr.rel (0) target = $region29
    $region28: #{_actor_forward_impl.1} parent=1 // pred_region
      _
    $region29: #{_actor_forward_impl.1} parent=1 // pred_fallthru
      _
    %v28 = vld [vmem:[%s0] sm:$0xff]
    %v29 = vpack.c.bf16 %v28, %v28
    %v30 = vld [vmem:[%s1] sm:$0xf]
    %v31 = vld [vmem:[%s1 + $0x4] sm:$0xf]
    %v32 = vld [vmem:[%s2] sm:$0x1]
    %v34 = vlaneseq
    %v35 = vshrl.u32 %v34, 7
    %v36 = vsub.s32 0, %v35
    %v37 = vrot.slane %v32, %v36
    %v41 = vunpack.c.l.b16 %v30
    %v42 = vunpack.c.l.b16 %v31
    %v43 = vpack.c.b16 %v42, %v41
    %vm45 = vcmask 130048
    %v47 = vsel %vm45, %v29, 0
    %49 = vmatprep.subr.bf16.mxu0 0
    %50 = vmatpush1.bf16.msra.mxu0 %v43
    %51 = vmatprep.subr.bf16.mxu0 0
    %52 = vmatpush1.bf16.msra.mxu0 0
    %53 = vmatprep.subr.bf16.mxu0 0
    %54 = vmatpush1.bf16.msra.mxu0 0
    %55 = vmatprep.subr.bf16.mxu0 0
    %56 = vmatpush1.bf16.msra.mxu0 0
    %57 = vmatprep.subr.bf16.mxu0 0
    %58 = vmatpush1.bf16.msra.mxu0 0
    %59 = vmatprep.subr.bf16.mxu0 0
    %60 = vmatpush1.bf16.msra.mxu0 0
    %61 = vmatprep.subr.bf16.mxu0 0
    %62 = vmatpush1.bf16.msra.mxu0 0
    %63 = vmatprep.subr.bf16.mxu0 0
    %64 = vmatpush1.bf16.msra.mxu0 0
    %65 = vmatprep.subr.bf16.mxu0 0
    %66 = vmatpush1.bf16.msra.mxu0 0
    %67 = vmatprep.subr.bf16.mxu0 0
    %68 = vmatpush1.bf16.msra.mxu0 0
    %69 = vmatprep.subr.bf16.mxu0 0
    %70 = vmatpush1.bf16.msra.mxu0 0
    %71 = vmatprep.subr.bf16.mxu0 0
    %72 = vmatpush1.bf16.msra.mxu0 0
    %73 = vmatprep.subr.bf16.mxu0 0
    %74 = vmatpush1.bf16.msra.mxu0 0
    %75 = vmatprep.subr.bf16.mxu0 0
    %76 = vmatpush1.bf16.msra.mxu0 0
    %77 = vmatprep.subr.bf16.mxu0 0
    %78 = vmatpush1.bf16.msra.mxu0 0
    %79 = vmatprep.subr.bf16.mxu0 0
    %80 = vmatpush1.bf16.msra.mxu0 0
    %81 = vmatprep.mubr.bf16.mxu0 0
    %82 = vmatmul.mubr.bf16.gmra.mrb[0].mxu0 %v47
    %v83 = vpop.f32.mrb[0].mxu0
    %v84 = vadd.f32 %v37, %v83
    %v85 = vpop.f32.mrb[0].mxu0
    %v86 = vpop.f32.mrb[0].mxu0
    %v87 = vpop.f32.mrb[0].mxu0
    %88 = vdwg.mxu0
    %v89 = vmul.f32 %v84, 0.5
    %v90 = vmul.f32 %v84, 0.70710677
    %v91 = verf.f32.pop %v90
    %v92 = vadd.f32 %v91, 1.0
    %v93 = vmul.f32 %v89, %v92
    %v94 = vpack.c.bf16 %v93, %v93
    %v95 = vld [vmem:[%s3] sm:$0xf]
    %v96 = vld [vmem:[%s3 + $0x4] sm:$0xf]
    %v97 = vld [vmem:[%s3 + $0x8] sm:$0xf]
    %v98 = vld [vmem:[%s3 + $0xc] sm:$0xf]
    %v99 = vld [vmem:[%s3 + $0x10] sm:$0xf]
    %v100 = vld [vmem:[%s3 + $0x14] sm:$0xf]
    %v101 = vld [vmem:[%s3 + $0x18] sm:$0xf]
    %v102 = vld [vmem:[%s3 + $0x1c] sm:$0xf]
    %v103 = vld [vmem:[%s3 + $0x20] sm:$0xf]
    %v104 = vld [vmem:[%s3 + $0x24] sm:$0xf]
    %v105 = vld [vmem:[%s3 + $0x28] sm:$0xf]
    %v106 = vld [vmem:[%s3 + $0x2c] sm:$0xf]
    %v107 = vld [vmem:[%s3 + $0x30] sm:$0xf]
    %v108 = vld [vmem:[%s3 + $0x34] sm:$0xf]
    %v109 = vld [vmem:[%s3 + $0x38] sm:$0xf]
    %v110 = vld [vmem:[%s3 + $0x3c] sm:$0xf]
    %v111 = vld [vmem:[%s4] sm:$0x1]
    %v113 = vlaneseq
    %v114 = vshrl.u32 %v113, 7
    %v115 = vsub.s32 0, %v114
    %v116 = vrot.slane %v111, %v115
    %v134 = vunpack.c.l.b16 %v95
    %v135 = vunpack.c.l.b16 %v96
    %v136 = vunpack.c.l.b16 %v97
    %v137 = vunpack.c.l.b16 %v98
    %v138 = vunpack.c.l.b16 %v99
    %v139 = vunpack.c.l.b16 %v100
    %v140 = vunpack.c.l.b16 %v101
    %v141 = vunpack.c.l.b16 %v102
    %v142 = vunpack.c.l.b16 %v103
    %v143 = vunpack.c.l.b16 %v104
    %v144 = vunpack.c.l.b16 %v105
    %v145 = vunpack.c.l.b16 %v106
    %v146 = vunpack.c.l.b16 %v107
    %v147 = vunpack.c.l.b16 %v108
    %v148 = vunpack.c.l.b16 %v109
    %v149 = vunpack.c.l.b16 %v110
    %v150 = vpack.c.b16 %v135, %v134
    %v151 = vpack.c.b16 %v137, %v136
    %v152 = vpack.c.b16 %v139, %v138
    %v153 = vpack.c.b16 %v141, %v140
    %v154 = vpack.c.b16 %v143, %v142
    %v155 = vpack.c.b16 %v145, %v144
    %v156 = vpack.c.b16 %v147, %v146
    %v157 = vpack.c.b16 %v149, %v148
    %166 = vmatprep.subr.bf16.mxu0 0
    %167 = vmatpush1.bf16.msra.mxu0 %v150
    %168 = vmatprep.subr.bf16.mxu0 0
    %169 = vmatpush1.bf16.msra.mxu0 %v151
    %170 = vmatprep.subr.bf16.mxu0 0
    %171 = vmatpush1.bf16.msra.mxu0 %v152
    %172 = vmatprep.subr.bf16.mxu0 0
    %173 = vmatpush1.bf16.msra.mxu0 %v153
    %174 = vmatprep.subr.bf16.mxu0 0
    %175 = vmatpush1.bf16.msra.mxu0 %v154
    %176 = vmatprep.subr.bf16.mxu0 0
    %177 = vmatpush1.bf16.msra.mxu0 %v155
    %178 = vmatprep.subr.bf16.mxu0 0
    %179 = vmatpush1.bf16.msra.mxu0 %v156
    %180 = vmatprep.subr.bf16.mxu0 0
    %181 = vmatpush1.bf16.msra.mxu0 %v157
    %182 = vmatprep.subr.bf16.mxu0 0
    %183 = vmatpush1.bf16.msra.mxu0 0
    %184 = vmatprep.subr.bf16.mxu0 0
    %185 = vmatpush1.bf16.msra.mxu0 0
    %186 = vmatprep.subr.bf16.mxu0 0
    %187 = vmatpush1.bf16.msra.mxu0 0
    %188 = vmatprep.subr.bf16.mxu0 0
    %189 = vmatpush1.bf16.msra.mxu0 0
    %190 = vmatprep.subr.bf16.mxu0 0
    %191 = vmatpush1.bf16.msra.mxu0 0
    %192 = vmatprep.subr.bf16.mxu0 0
    %193 = vmatpush1.bf16.msra.mxu0 0
    %194 = vmatprep.subr.bf16.mxu0 0
    %195 = vmatpush1.bf16.msra.mxu0 0
    %196 = vmatprep.subr.bf16.mxu0 0
    %197 = vmatpush1.bf16.msra.mxu0 0
    %198 = vmatprep.mubr.bf16.mxu0 0
    %199 = vmatmul.mubr.bf16.gmra.mrb[0].mxu0 %v94
    %v200 = vpop.f32.mrb[0].mxu0
    %v201 = vadd.f32 %v116, %v200
    %v202 = vpop.f32.mrb[0].mxu0
    %v203 = vpop.f32.mrb[0].mxu0
    %v204 = vpop.f32.mrb[0].mxu0
    %205 = vdwg.mxu0
    %v206 = vmul.f32 %v201, 0.5
    %v207 = vmul.f32 %v201, 0.70710677
    %v208 = verf.f32.pop %v207
    %v209 = vadd.f32 %v208, 1.0
    %v210 = vmul.f32 %v206, %v209
    %v211 = vpack.c.bf16 %v210, %v210
    %v212 = vld [vmem:[%s5] sm:$0xf]
    %v213 = vld [vmem:[%s5 + $0x4] sm:$0xf]
    %v214 = vld [vmem:[%s5 + $0x8] sm:$0xf]
    %v215 = vld [vmem:[%s5 + $0xc] sm:$0xf]
    %v216 = vld [vmem:[%s5 + $0x10] sm:$0xf]
    %v217 = vld [vmem:[%s5 + $0x14] sm:$0xf]
    %v218 = vld [vmem:[%s5 + $0x18] sm:$0xf]
    %v219 = vld [vmem:[%s5 + $0x1c] sm:$0xf]
    %v220 = vld [vmem:[%s5 + $0x20] sm:$0xf]
    %v221 = vld [vmem:[%s5 + $0x24] sm:$0xf]
    %v222 = vld [vmem:[%s5 + $0x28] sm:$0xf]
    %v223 = vld [vmem:[%s5 + $0x2c] sm:$0xf]
    %v224 = vld [vmem:[%s5 + $0x30] sm:$0xf]
    %v225 = vld [vmem:[%s5 + $0x34] sm:$0xf]
    %v226 = vld [vmem:[%s5 + $0x38] sm:$0xf]
    %v227 = vld [vmem:[%s5 + $0x3c] sm:$0xf]
    %v228 = vld [vmem:[%s6] sm:$0x1]
    %v230 = vlaneseq
    %v231 = vshrl.u32 %v230, 7
    %v232 = vsub.s32 0, %v231
    %v233 = vrot.slane %v228, %v232
    %v251 = vunpack.c.l.b16 %v212
    %v252 = vunpack.c.l.b16 %v213
    %v253 = vunpack.c.l.b16 %v214
    %v254 = vunpack.c.l.b16 %v215
    %v255 = vunpack.c.l.b16 %v216
    %v256 = vunpack.c.l.b16 %v217
    %v257 = vunpack.c.l.b16 %v218
    %v258 = vunpack.c.l.b16 %v219
    %v259 = vunpack.c.l.b16 %v220
    %v260 = vunpack.c.l.b16 %v221
    %v261 = vunpack.c.l.b16 %v222
    %v262 = vunpack.c.l.b16 %v223
    %v263 = vunpack.c.l.b16 %v224
    %v264 = vunpack.c.l.b16 %v225
    %v265 = vunpack.c.l.b16 %v226
    %v266 = vunpack.c.l.b16 %v227
    %v267 = vpack.c.b16 %v252, %v251
    %v268 = vpack.c.b16 %v254, %v253
    %v269 = vpack.c.b16 %v256, %v255
    %v270 = vpack.c.b16 %v258, %v257
    %v271 = vpack.c.b16 %v260, %v259
    %v272 = vpack.c.b16 %v262, %v261
    %v273 = vpack.c.b16 %v264, %v263
    %v274 = vpack.c.b16 %v266, %v265
    %283 = vmatprep.subr.bf16.mxu0 0
    %284 = vmatpush1.bf16.msra.mxu0 %v267
    %285 = vmatprep.subr.bf16.mxu0 0
    %286 = vmatpush1.bf16.msra.mxu0 %v268
    %287 = vmatprep.subr.bf16.mxu0 0
    %288 = vmatpush1.bf16.msra.mxu0 %v269
    %289 = vmatprep.subr.bf16.mxu0 0
    %290 = vmatpush1.bf16.msra.mxu0 %v270
    %291 = vmatprep.subr.bf16.mxu0 0
    %292 = vmatpush1.bf16.msra.mxu0 %v271
    %293 = vmatprep.subr.bf16.mxu0 0
    %294 = vmatpush1.bf16.msra.mxu0 %v272
    %295 = vmatprep.subr.bf16.mxu0 0
    %296 = vmatpush1.bf16.msra.mxu0 %v273
    %297 = vmatprep.subr.bf16.mxu0 0
    %298 = vmatpush1.bf16.msra.mxu0 %v274
    %299 = vmatprep.subr.bf16.mxu0 0
    %300 = vmatpush1.bf16.msra.mxu0 0
    %301 = vmatprep.subr.bf16.mxu0 0
    %302 = vmatpush1.bf16.msra.mxu0 0
    %303 = vmatprep.subr.bf16.mxu0 0
    %304 = vmatpush1.bf16.msra.mxu0 0
    %305 = vmatprep.subr.bf16.mxu0 0
    %306 = vmatpush1.bf16.msra.mxu0 0
    %307 = vmatprep.subr.bf16.mxu0 0
    %308 = vmatpush1.bf16.msra.mxu0 0
    %309 = vmatprep.subr.bf16.mxu0 0
    %310 = vmatpush1.bf16.msra.mxu0 0
    %311 = vmatprep.subr.bf16.mxu0 0
    %312 = vmatpush1.bf16.msra.mxu0 0
    %313 = vmatprep.subr.bf16.mxu0 0
    %314 = vmatpush1.bf16.msra.mxu0 0
    %315 = vmatprep.mubr.bf16.mxu0 0
    %316 = vmatmul.mubr.bf16.gmra.mrb[0].mxu0 %v211
    %v317 = vpop.f32.mrb[0].mxu0
    %v318 = vadd.f32 %v233, %v317
    %v319 = vpop.f32.mrb[0].mxu0
    %v320 = vpop.f32.mrb[0].mxu0
    %v321 = vpop.f32.mrb[0].mxu0
    %322 = vdwg.mxu0
    %vm323 = vcmask 48128
    %324 = vst.msk [vmem:[#allocation2] sm:$0xff] %vm323, %v318
    // Predicated region
    $region30: #{_actor_forward_impl.1} parent=1 // pred_check
      _
    $region31: #{_actor_forward_impl.1} parent=1 // pred_check_branch
      %326 = sbr.rel (0) target = $region33
    $region32: #{_actor_forward_impl.1} parent=1 // pred_region
      %s328 = ssub.s32 128, 128
      %329 = vsyncadd [#allocation3], %s328
      %s331 = sshll.u32 [#allocation2], 4
      %s332 = int_to_ptr.vmem [resolvable:$true] %s331
      %334 = dma.vmem_to_hbm [thread:$0]  %s332, 128, %s7, [#allocation3]
    $region33: #{_actor_forward_impl.1} parent=1 // pred_fallthru
      _
    // Predicated region
    $region34: #{_actor_forward_impl.1} parent=1 // pred_check
      _
    $region35: #{_actor_forward_impl.1} parent=1 // pred_check_branch
      %336 = sbr.rel (0) target = $region37
    $region36: #{_actor_forward_impl.1} parent=1 // pred_region
      %337 = dma.done [#allocation3], 128
    $region37: #{_actor_forward_impl.1} parent=1 // pred_fallthru
      _
    %338 = vsyncpa [#allocation3], 1

</llo_original>
